<compile_context>
chip_gen: v5e
topology: v5e:2x2
jax: 0.10.0
libtpu: 0.0.40
codegen_flags: <defaults>
</compile_context>

<pallas_src>
import jax
import jax.numpy as jnp
from jax.experimental import pallas as pl
from jax.experimental.pallas import tpu as pltpu


def attn_decoder_kernel(
    tok_ref,                       # (B, 1) int32
    h_ref,                         # (B, H) f32
    enc_ref,                       # (B, M, 2H) f32
    emb_ref,                       # (Vocab, E) bf16  embedding table
    wx_ref,                        # (E, M+E)  bf16   [attn x-part | attn_combine x-part]
    wh_ref,                        # (H, M+3H) bf16   [attn h-part | GRU w_hh]
    ba_ref,                        # (1, M)  f32
    wca_ref,                       # (2H, E) bf16     attn_combine, attn_applied part
    bc_ref,                        # (1, E)  f32
    wih_ref,                       # (E, 3H) bf16     GRU w_ih (gate order r, z, n)
    bih_ref, bhh_ref,              # (1, 3H) f32
    wout_ref,                      # (H, V)  bf16
    bout_ref,                      # (1, V)  f32
    out_ref,                       # (B, P)  f32 packed: [logits | h_new | attn_w | 0-pad]
):
    B, H = h_ref.shape
    M = ba_ref.shape[1]
    V = bout_ref.shape[1]
    P = out_ref.shape[1]
    vocab = emb_ref.shape[0]

    h = h_ref[...]                                        # (B, H) f32
    h_bf = h.astype(jnp.bfloat16)

    # --- embedding lookup fused as a one-hot matmul (exactly selects bf16 rows) ---
    tok = tok_ref[...]                                    # (B, 1) int32
    col = jax.lax.broadcasted_iota(jnp.int32, (B, vocab), 1)
    onehot = (col == tok).astype(jnp.float32).astype(jnp.bfloat16)
    x_bf = jnp.dot(onehot, emb_ref[...],
                   preferred_element_type=jnp.float32).astype(jnp.bfloat16)  # (B, E)

    # --- fused x-side / h-side matmuls (single MXU pass each) ---
    xw = jnp.dot(x_bf, wx_ref[...], preferred_element_type=jnp.float32)   # (B, M+E)
    hw = jnp.dot(h_bf, wh_ref[...], preferred_element_type=jnp.float32)   # (B, M+3H)

    # --- attention softmax (f32 on VPU/EUP) ---
    attn_logits = xw[:, :M] + hw[:, :M] + ba_ref[...]                     # (B, M)
    mx = jnp.max(attn_logits, axis=1, keepdims=True)
    e = jnp.exp(attn_logits - mx)
    inv = pl.reciprocal(jnp.sum(e, axis=1, keepdims=True), approx=True)
    attn_w = e * inv                                                      # (B, M)

    # bmm(attn_w (B,1,M), enc (B,M,2H)) -> (B, 2H): broadcast-mul + reduce (M small)
    attn_applied = jnp.sum(attn_w[:, :, None] * enc_ref[...], axis=1)     # (B, 2H)

    # --- attn_combine + ReLU -> GRU input ---
    comb = (xw[:, M:]
            + jnp.dot(attn_applied.astype(jnp.bfloat16), wca_ref[...],
                      preferred_element_type=jnp.float32)
            + bc_ref[...])
    g = jnp.maximum(comb, 0.0)                                            # (B, E)

    # --- single-step, single-layer GRU cell (PyTorch gate order r, z, n) ---
    gi = jnp.dot(g.astype(jnp.bfloat16), wih_ref[...],
                 preferred_element_type=jnp.float32) + bih_ref[...]       # (B, 3H)
    gh = hw[:, M:] + bhh_ref[...]                                         # (B, 3H)
    r = jax.nn.sigmoid(gi[:, 0:H] + gh[:, 0:H])
    z = jax.nn.sigmoid(gi[:, H:2 * H] + gh[:, H:2 * H])
    n = jnp.tanh(gi[:, 2 * H:3 * H] + r * gh[:, 2 * H:3 * H])
    h_new = (1.0 - z) * n + z * h                                         # (B, H)

    # --- output projection ---
    logits = jnp.dot(h_new.astype(jnp.bfloat16), wout_ref[...],
                     preferred_element_type=jnp.float32) + bout_ref[...]  # (B, V)

    # --- single lane-dense packed store (one unmasked vst, one writeback DMA) ---
    pieces = [logits, h_new, attn_w]
    pad = P - (V + H + M)
    if pad:
        pieces.append(jnp.zeros((B, pad), jnp.float32))
    out_ref[...] = jnp.concatenate(pieces, axis=1)


def attn_decoder_forward(params, token, hidden, encoder_outputs):
    """token (1,B) int32, hidden (1,B,H), encoder_outputs (M,B,2H).
    Returns (logits (B,V), hidden (1,B,H), attn_weights (B,M), None)."""
    B = token.shape[1]
    M, _, twoH = encoder_outputs.shape
    H = hidden.shape[2]
    V = params["b_out"].shape[1]
    W = V + H + M
    P = ((W + 127) // 128) * 128          # pad packed output to full 128-lane width

    tok = token[0].reshape(B, 1).astype(jnp.int32)         # (B, 1)
    h0 = hidden[0]                                          # (B, H)
    # raw `.view(-1, max_ingr, 2*hidden)` reinterpretation, exactly as in the
    # PyTorch code (NOT a transpose).
    enc = jnp.reshape(encoder_outputs, (B, M, twoH))        # (B, M, 2H)

    vmem = pl.BlockSpec(memory_space=pltpu.MemorySpace.VMEM)
    ins = (
        tok, h0, enc,
        params["embedding"], params["w_x"], params["w_h"], params["ba"],
        params["wc_a"], params["bc"], params["w_ih"],
        params["b_ih"], params["b_hh"], params["w_out"], params["b_out"],
    )
    packed = pl.pallas_call(
        attn_decoder_kernel,
        out_shape=jax.ShapeDtypeStruct((B, P), jnp.float32),
        in_specs=[vmem] * len(ins),
        out_specs=vmem,
    )(*ins)

    logits = packed[:, :V]
    h_new = packed[:, V:V + H]
    attn_w = packed[:, V + H:V + H + M]
    return logits, h_new[None], attn_w, None


def init_params(key, vocab, E, H, M):
    """Deterministic synthetic parameters. PyTorch Linear stores (out,in); we store
    the transpose (in,out). Weights feeding the MXU are stored in bfloat16 and the
    x-/h-side matmuls are fused at init time by concatenating along the output axis."""
    ks = jax.random.split(key, 12)

    def rnd(k, shape, scale=0.1):
        return scale * jax.random.normal(k, shape, dtype=jnp.float32)

    wa_e = rnd(ks[1], (E, M))            # attn, embedded part
    wa_h = rnd(ks[2], (H, M))            # attn, hidden part
    wc_e = rnd(ks[4], (E, E))            # attn_combine, embedded part
    wc_a = rnd(ks[5], (2 * H, E))        # attn_combine, attn_applied part
    w_ih = rnd(ks[7], (E, 3 * H))        # GRU input weights  [r,z,n]
    w_hh = rnd(ks[8], (H, 3 * H))        # GRU hidden weights [r,z,n]
    w_out = rnd(ks[11], (H, vocab))

    bf = jnp.bfloat16
    return dict(
        embedding=rnd(ks[0], (vocab, E)).astype(bf),
        # fused x-side weights: lanes [0:M) = attn, [M:M+E) = attn_combine x-part
        w_x=jnp.concatenate([wa_e, wc_e], axis=1).astype(bf),
        # fused h-side weights: lanes [0:M) = attn, [M:M+3H) = GRU w_hh
        w_h=jnp.concatenate([wa_h, w_hh], axis=1).astype(bf),
        ba=rnd(ks[3], (1, M)),
        wc_a=wc_a.astype(bf),
        bc=rnd(ks[6], (1, E)),
        w_ih=w_ih.astype(bf),
        b_ih=rnd(ks[9], (1, 3 * H)),
        b_hh=rnd(ks[10], (1, 3 * H)),
        w_out=w_out.astype(bf),
        b_out=0.01 * jnp.ones((1, vocab), jnp.float32),
    )


def reference(params, token, hidden, encoder_outputs):
    """Pure-JAX f32 replica of the PyTorch forward (eval mode) for validation,
    written in the original un-fused form using slices of the fused weights."""
    f32 = jnp.float32
    H = hidden.shape[2]
    M = params["ba"].shape[1]

    w_x = params["w_x"].astype(f32)
    w_h = params["w_h"].astype(f32)
    wa_e, wc_e = w_x[:, :M], w_x[:, M:]
    wa_h, w_hh = w_h[:, :M], w_h[:, M:]

    emb = params["embedding"].astype(f32)[token[0]]
    h = hidden[0]
    B = emb.shape[0]

    cat1 = jnp.concatenate([emb, h], axis=1)
    w_attn = jnp.concatenate([wa_e, wa_h], axis=0)
    attn_w = jax.nn.softmax(cat1 @ w_attn + params["ba"][0], axis=1)
    enc = jnp.reshape(encoder_outputs, (B, M, -1))
    applied = jnp.einsum("bm,bmd->bd", attn_w, enc)
    cat2 = jnp.concatenate([emb, applied], axis=1)
    w_comb = jnp.concatenate([wc_e, params["wc_a"].astype(f32)], axis=0)
    g = jax.nn.relu(cat2 @ w_comb + params["bc"][0])
    gi = g @ params["w_ih"].astype(f32) + params["b_ih"][0]
    gh = h @ w_hh + params["b_hh"][0]
    r = jax.nn.sigmoid(gi[:, :H] + gh[:, :H])
    z = jax.nn.sigmoid(gi[:, H:2 * H] + gh[:, H:2 * H])
    n = jnp.tanh(gi[:, 2 * H:] + r * gh[:, 2 * H:])
    h_new = (1.0 - z) * n + z * h
    logits = h_new @ params["w_out"].astype(f32) + params["b_out"][0]
    return logits, h_new, attn_w


if __name__ == "__main__":
    # batch, hidden, word_embed, max_ingr, vocab, gru layers (B>=8 -> full f32 sublane groups)
    B, H, E, M, V, L = 8, 32, 32, 8, 64, 1
    key = jax.random.PRNGKey(0)
    pkey, k_tok, k_hid, k_enc = jax.random.split(key, 4)

    params = init_params(pkey, V, E, H, M)
    token = jax.random.randint(k_tok, (1, B), 0, V, dtype=jnp.int32)            # (1, B)
    hidden = 0.1 * jax.random.normal(k_hid, (L, B, H), dtype=jnp.float32)       # (1, B, H)
    enc_out = 0.1 * jax.random.normal(k_enc, (M, B, 2 * H), dtype=jnp.float32)  # (M, B, 2H)

    logits, h_new, attn_w, _ = attn_decoder_forward(params, token, hidden, enc_out)
    jax.block_until_ready((logits, h_new, attn_w))

    ref_logits, ref_h, ref_w = reference(params, token, hidden, enc_out)
    assert logits.shape == (B, V) and h_new.shape == (L, B, H) and attn_w.shape == (B, M)
    # tolerances account for bf16 activation casts + approx reciprocal in softmax
    assert jnp.allclose(attn_w, ref_w, atol=2e-3, rtol=2e-3)
    assert jnp.allclose(h_new[0], ref_h, atol=5e-3, rtol=5e-3)
    assert jnp.allclose(logits, ref_logits, atol=5e-3, rtol=5e-3)
    print("KERNEL_OK")
</pallas_src>

<mosaic_0001>
module attributes {stable_mosaic.version = 11 : i64} {
  func.func @attn_decoder_kernel(%arg0: memref<8x1xi32, #tpu.memory_space<vmem>>, %arg1: memref<8x32xf32, #tpu.memory_space<vmem>>, %arg2: memref<8x8x64xf32, #tpu.memory_space<vmem>>, %arg3: memref<64x32xbf16, #tpu.memory_space<vmem>>, %arg4: memref<32x40xbf16, #tpu.memory_space<vmem>>, %arg5: memref<32x104xbf16, #tpu.memory_space<vmem>>, %arg6: memref<1x8xf32, #tpu.memory_space<vmem>>, %arg7: memref<64x32xbf16, #tpu.memory_space<vmem>>, %arg8: memref<1x32xf32, #tpu.memory_space<vmem>>, %arg9: memref<32x96xbf16, #tpu.memory_space<vmem>>, %arg10: memref<1x96xf32, #tpu.memory_space<vmem>>, %arg11: memref<1x96xf32, #tpu.memory_space<vmem>>, %arg12: memref<32x64xbf16, #tpu.memory_space<vmem>>, %arg13: memref<1x64xf32, #tpu.memory_space<vmem>>, %arg14: memref<8x128xf32, #tpu.memory_space<vmem>>) attributes {dimension_semantics = [], scalar_prefetch = 0 : i64, scratch_operands = 0 : i64, tpu.core_type = #tpu.core_type<tc>} {
    %c0 = arith.constant 0 : index
    %c0_0 = arith.constant 0 : index
    %0 = vector.load %arg1[%c0, %c0_0] : memref<8x32xf32, #tpu.memory_space<vmem>>, vector<8x32xf32>
    %1 = arith.truncf %0 : vector<8x32xf32> to vector<8x32xbf16>
    %c0_1 = arith.constant 0 : index
    %c0_2 = arith.constant 0 : index
    %2 = vector.load %arg0[%c0_1, %c0_2] : memref<8x1xi32, #tpu.memory_space<vmem>>, vector<8x1xi32>
    %3 = tpu.iota {dimensions = array<i32: 1>} : vector<8x64xi32>
    %4 = vector.broadcast %2 : vector<8x1xi32> to vector<8x64xi32>
    %5 = arith.cmpi eq, %3, %4 : vector<8x64xi32>
    %6 = arith.extui %5 : vector<8x64xi1> to vector<8x64xi32>
    %7 = arith.sitofp %6 : vector<8x64xi32> to vector<8x64xf32>
    %8 = arith.truncf %7 : vector<8x64xf32> to vector<8x64xbf16>
    %c0_3 = arith.constant 0 : index
    %c0_4 = arith.constant 0 : index
    %9 = vector.load %arg3[%c0_3, %c0_4] : memref<64x32xbf16, #tpu.memory_space<vmem>>, vector<64x32xbf16>
    %cst = arith.constant dense<0.000000e+00> : vector<8x32xf32>
    %10 = tpu.matmul %8, %9, %cst {dimension_numbers = #tpu.dot_dimension_numbers<[1], [0], [0], [1], [0, 0, 1, 1], [], []>} : vector<8x64xbf16>, vector<64x32xbf16>, vector<8x32xf32> -> vector<8x32xf32>
    %11 = arith.truncf %10 : vector<8x32xf32> to vector<8x32xbf16>
    %c0_5 = arith.constant 0 : index
    %c0_6 = arith.constant 0 : index
    %12 = vector.load %arg4[%c0_5, %c0_6] : memref<32x40xbf16, #tpu.memory_space<vmem>>, vector<32x40xbf16>
    %cst_7 = arith.constant dense<0.000000e+00> : vector<8x40xf32>
    %13 = tpu.matmul %11, %12, %cst_7 {dimension_numbers = #tpu.dot_dimension_numbers<[1], [0], [0], [1], [0, 0, 1, 1], [], []>} : vector<8x32xbf16>, vector<32x40xbf16>, vector<8x40xf32> -> vector<8x40xf32>
    %c0_8 = arith.constant 0 : index
    %c0_9 = arith.constant 0 : index
    %14 = vector.load %arg5[%c0_8, %c0_9] : memref<32x104xbf16, #tpu.memory_space<vmem>>, vector<32x104xbf16>
    %cst_10 = arith.constant dense<0.000000e+00> : vector<8x104xf32>
    %15 = tpu.matmul %1, %14, %cst_10 {dimension_numbers = #tpu.dot_dimension_numbers<[1], [0], [0], [1], [0, 0, 1, 1], [], []>} : vector<8x32xbf16>, vector<32x104xbf16>, vector<8x104xf32> -> vector<8x104xf32>
    %16 = vector.extract_strided_slice %13 {offsets = [0, 0], sizes = [8, 8], strides = [1, 1]} : vector<8x40xf32> to vector<8x8xf32>
    %17 = vector.extract_strided_slice %15 {offsets = [0, 0], sizes = [8, 8], strides = [1, 1]} : vector<8x104xf32> to vector<8x8xf32>
    %18 = arith.addf %16, %17 : vector<8x8xf32>
    %c0_11 = arith.constant 0 : index
    %c0_12 = arith.constant 0 : index
    %19 = vector.load %arg6[%c0_11, %c0_12] : memref<1x8xf32, #tpu.memory_space<vmem>>, vector<1x8xf32>
    %20 = vector.broadcast %19 : vector<1x8xf32> to vector<8x8xf32>
    %21 = arith.addf %18, %20 : vector<8x8xf32>
    %cst_13 = arith.constant dense<0xFF800000> : vector<8xf32>
    %22 = vector.multi_reduction <maximumf>, %21, %cst_13 [1] : vector<8x8xf32> to vector<8xf32>
    %23 = vector.shape_cast %22 : vector<8xf32> to vector<8x1xf32>
    %24 = vector.broadcast %23 : vector<8x1xf32> to vector<8x8xf32>
    %25 = arith.subf %21, %24 : vector<8x8xf32>
    %26 = math.exp %25 : vector<8x8xf32>
    %cst_14 = arith.constant dense<0.000000e+00> : vector<8xf32>
    %27 = vector.multi_reduction <add>, %26, %cst_14 [1] : vector<8x8xf32> to vector<8xf32>
    %28 = vector.shape_cast %27 : vector<8xf32> to vector<8x1xf32>
    %29 = tpu.reciprocal %28 {approx = true} : vector<8x1xf32> -> vector<8x1xf32>
    %30 = vector.broadcast %29 : vector<8x1xf32> to vector<8x8xf32>
    %31 = arith.mulf %26, %30 : vector<8x8xf32>
    %32 = vector.shape_cast %31 : vector<8x8xf32> to vector<8x8x1xf32>
    %c0_15 = arith.constant 0 : index
    %c0_16 = arith.constant 0 : index
    %c0_17 = arith.constant 0 : index
    %33 = vector.load %arg2[%c0_15, %c0_16, %c0_17] : memref<8x8x64xf32, #tpu.memory_space<vmem>>, vector<8x8x64xf32>
    %34 = vector.broadcast %32 : vector<8x8x1xf32> to vector<8x8x64xf32>
    %35 = arith.mulf %34, %33 : vector<8x8x64xf32>
    %cst_18 = arith.constant dense<0.000000e+00> : vector<8x64xf32>
    %36 = vector.multi_reduction <add>, %35, %cst_18 [1] : vector<8x8x64xf32> to vector<8x64xf32>
    %37 = vector.extract_strided_slice %13 {offsets = [0, 8], sizes = [8, 32], strides = [1, 1]} : vector<8x40xf32> to vector<8x32xf32>
    %38 = arith.truncf %36 : vector<8x64xf32> to vector<8x64xbf16>
    %c0_19 = arith.constant 0 : index
    %c0_20 = arith.constant 0 : index
    %39 = vector.load %arg7[%c0_19, %c0_20] : memref<64x32xbf16, #tpu.memory_space<vmem>>, vector<64x32xbf16>
    %cst_21 = arith.constant dense<0.000000e+00> : vector<8x32xf32>
    %40 = tpu.matmul %38, %39, %cst_21 {dimension_numbers = #tpu.dot_dimension_numbers<[1], [0], [0], [1], [0, 0, 1, 1], [], []>} : vector<8x64xbf16>, vector<64x32xbf16>, vector<8x32xf32> -> vector<8x32xf32>
    %41 = arith.addf %37, %40 : vector<8x32xf32>
    %c0_22 = arith.constant 0 : index
    %c0_23 = arith.constant 0 : index
    %42 = vector.load %arg8[%c0_22, %c0_23] : memref<1x32xf32, #tpu.memory_space<vmem>>, vector<1x32xf32>
    %43 = vector.broadcast %42 : vector<1x32xf32> to vector<8x32xf32>
    %44 = arith.addf %41, %43 : vector<8x32xf32>
    %cst_24 = arith.constant 0.000000e+00 : f32
    %45 = vector.broadcast %cst_24 : f32 to vector<8x32xf32>
    %46 = arith.maximumf %44, %45 : vector<8x32xf32>
    %47 = arith.truncf %46 : vector<8x32xf32> to vector<8x32xbf16>
    %c0_25 = arith.constant 0 : index
    %c0_26 = arith.constant 0 : index
    %48 = vector.load %arg9[%c0_25, %c0_26] : memref<32x96xbf16, #tpu.memory_space<vmem>>, vector<32x96xbf16>
    %cst_27 = arith.constant dense<0.000000e+00> : vector<8x96xf32>
    %49 = tpu.matmul %47, %48, %cst_27 {dimension_numbers = #tpu.dot_dimension_numbers<[1], [0], [0], [1], [0, 0, 1, 1], [], []>} : vector<8x32xbf16>, vector<32x96xbf16>, vector<8x96xf32> -> vector<8x96xf32>
    %c0_28 = arith.constant 0 : index
    %c0_29 = arith.constant 0 : index
    %50 = vector.load %arg10[%c0_28, %c0_29] : memref<1x96xf32, #tpu.memory_space<vmem>>, vector<1x96xf32>
    %51 = vector.broadcast %50 : vector<1x96xf32> to vector<8x96xf32>
    %52 = arith.addf %49, %51 : vector<8x96xf32>
    %53 = vector.extract_strided_slice %15 {offsets = [0, 8], sizes = [8, 96], strides = [1, 1]} : vector<8x104xf32> to vector<8x96xf32>
    %c0_30 = arith.constant 0 : index
    %c0_31 = arith.constant 0 : index
    %54 = vector.load %arg11[%c0_30, %c0_31] : memref<1x96xf32, #tpu.memory_space<vmem>>, vector<1x96xf32>
    %55 = vector.broadcast %54 : vector<1x96xf32> to vector<8x96xf32>
    %56 = arith.addf %53, %55 : vector<8x96xf32>
    %57 = vector.extract_strided_slice %52 {offsets = [0, 0], sizes = [8, 32], strides = [1, 1]} : vector<8x96xf32> to vector<8x32xf32>
    %58 = vector.extract_strided_slice %56 {offsets = [0, 0], sizes = [8, 32], strides = [1, 1]} : vector<8x96xf32> to vector<8x32xf32>
    %59 = arith.addf %57, %58 : vector<8x32xf32>
    %60 = arith.negf %59 : vector<8x32xf32>
    %61 = math.exp %60 : vector<8x32xf32>
    %cst_32 = arith.constant 1.000000e+00 : f32
    %62 = vector.broadcast %cst_32 : f32 to vector<8x32xf32>
    %63 = arith.addf %62, %61 : vector<8x32xf32>
    %64 = arith.divf %62, %63 : vector<8x32xf32>
    %65 = vector.extract_strided_slice %52 {offsets = [0, 32], sizes = [8, 32], strides = [1, 1]} : vector<8x96xf32> to vector<8x32xf32>
    %66 = vector.extract_strided_slice %56 {offsets = [0, 32], sizes = [8, 32], strides = [1, 1]} : vector<8x96xf32> to vector<8x32xf32>
    %67 = arith.addf %65, %66 : vector<8x32xf32>
    %68 = arith.negf %67 : vector<8x32xf32>
    %69 = math.exp %68 : vector<8x32xf32>
    %cst_33 = arith.constant 1.000000e+00 : f32
    %70 = vector.broadcast %cst_33 : f32 to vector<8x32xf32>
    %71 = arith.addf %70, %69 : vector<8x32xf32>
    %72 = arith.divf %70, %71 : vector<8x32xf32>
    %73 = vector.extract_strided_slice %52 {offsets = [0, 64], sizes = [8, 32], strides = [1, 1]} : vector<8x96xf32> to vector<8x32xf32>
    %74 = vector.extract_strided_slice %56 {offsets = [0, 64], sizes = [8, 32], strides = [1, 1]} : vector<8x96xf32> to vector<8x32xf32>
    %75 = arith.mulf %64, %74 : vector<8x32xf32>
    %76 = arith.addf %73, %75 : vector<8x32xf32>
    %77 = math.tanh %76 : vector<8x32xf32>
    %cst_34 = arith.constant 1.000000e+00 : f32
    %78 = vector.broadcast %cst_34 : f32 to vector<8x32xf32>
    %79 = arith.subf %78, %72 : vector<8x32xf32>
    %80 = arith.mulf %79, %77 : vector<8x32xf32>
    %81 = arith.mulf %72, %0 : vector<8x32xf32>
    %82 = arith.addf %80, %81 : vector<8x32xf32>
    %83 = arith.truncf %82 : vector<8x32xf32> to vector<8x32xbf16>
    %c0_35 = arith.constant 0 : index
    %c0_36 = arith.constant 0 : index
    %84 = vector.load %arg12[%c0_35, %c0_36] : memref<32x64xbf16, #tpu.memory_space<vmem>>, vector<32x64xbf16>
    %cst_37 = arith.constant dense<0.000000e+00> : vector<8x64xf32>
    %85 = tpu.matmul %83, %84, %cst_37 {dimension_numbers = #tpu.dot_dimension_numbers<[1], [0], [0], [1], [0, 0, 1, 1], [], []>} : vector<8x32xbf16>, vector<32x64xbf16>, vector<8x64xf32> -> vector<8x64xf32>
    %c0_38 = arith.constant 0 : index
    %c0_39 = arith.constant 0 : index
    %86 = vector.load %arg13[%c0_38, %c0_39] : memref<1x64xf32, #tpu.memory_space<vmem>>, vector<1x64xf32>
    %87 = vector.broadcast %86 : vector<1x64xf32> to vector<8x64xf32>
    %88 = arith.addf %85, %87 : vector<8x64xf32>
    %cst_40 = arith.constant 0.000000e+00 : f32
    %89 = vector.broadcast %cst_40 : f32 to vector<8x24xf32>
    %90 = tpu.concatenate %88, %82, %31, %89 in 1 : vector<8x64xf32>, vector<8x32xf32>, vector<8x8xf32>, vector<8x24xf32> -> vector<8x128xf32>
    %c0_41 = arith.constant 0 : index
    %c0_42 = arith.constant 0 : index
    %91 = vector.load %arg14[%c0_41, %c0_42] : memref<8x128xf32, #tpu.memory_space<vmem>>, vector<8x128xf32>
    tpu.vector_store %arg14[%c0_41, %c0_42], %90 {strides = array<i32>} : memref<8x128xf32, #tpu.memory_space<vmem>>, vector<8x128xf32>,
    return
  }
}

</mosaic_0001>

<llo_original>
// kernel: tpu_custom_call.1
$region0: #{tpu_custom_call.1}
  #allocation0 [shape = 'u32[]', space=smem, size = 0x4, offset = 0x4, fixed_abs, tag = 'smem constant byte address 0x4 - core index']
  #allocation1 [shape = 'u32[72,128]{1,0:T(1,128)}', space=vmem, size = 0x9000, scoped, tag = 'internal scratch']
  %s0 = inlined_call_operand.vmem [shape: s32[8,1], index: 0, kind: input, shape index: {}]
  %s1 = inlined_call_operand.hbm [shape: f32[8,32], index: 1, kind: input, shape index: {}]
  %s2 = inlined_call_operand.vmem [shape: f32[8,8,64], index: 2, kind: input, shape index: {}]
  %s3 = inlined_call_operand.vmem [shape: bf16[64,32], index: 3, kind: input, shape index: {}]
  %s4 = inlined_call_operand.vmem [shape: bf16[32,40], index: 4, kind: input, shape index: {}]
  %s5 = inlined_call_operand.hbm [shape: bf16[32,104], index: 5, kind: input, shape index: {}]
  %s6 = inlined_call_operand.hbm [shape: f32[1,8], index: 6, kind: input, shape index: {}]
  %s7 = inlined_call_operand.vmem [shape: bf16[64,32], index: 7, kind: input, shape index: {}]
  %s8 = inlined_call_operand.hbm [shape: f32[1,32], index: 8, kind: input, shape index: {}]
  %s9 = inlined_call_operand.vmem [shape: bf16[32,96], index: 9, kind: input, shape index: {}]
  %s10 = inlined_call_operand.vmem [shape: f32[1,96], index: 10, kind: input, shape index: {}]
  %s11 = inlined_call_operand.vmem [shape: f32[1,96], index: 11, kind: input, shape index: {}]
  %s12 = inlined_call_operand.hbm [shape: bf16[32,64], index: 12, kind: input, shape index: {}]
  %s13 = inlined_call_operand.vmem [shape: f32[1,64], index: 13, kind: input, shape index: {}]
  %s14 = inlined_call_operand.hbm [shape: f32[8,128], index: 14, kind: output, shape index: {}]
  %s15 = sld [smem:[#allocation0]]
  $region86: #{tpu_custom_call.1} parent=0
    _
  %s17 = ssub.s32 1, %s15
  %s18 = scalar_select 0, %s17, %s15
  $region1: #{tpu_custom_call.1} parent=0
    #allocation2 [shape = 'u8[4096]{0}', space=vmem, size = 0x1000, scoped, tag = 'input window, operand 1, single buffered']
    #allocation3 [shape = 's32[1]{0}', space=sflag, size = 0x4, scoped, tag = 'scoped memory for tpu_custom_call.1']
    #allocation4 [shape = 's32[1]{0}', space=sflag, size = 0x4, scoped, tag = 'scoped memory for tpu_custom_call.1']
    #allocation5 [shape = 'u8[8192]{0}', space=vmem, size = 0x2000, scoped, tag = 'input window, operand 5, single buffered']
    #allocation6 [shape = 's32[1]{0}', space=sflag, size = 0x4, scoped, tag = 'scoped memory for tpu_custom_call.1']
    #allocation7 [shape = 'u8[512]{0}', space=vmem, size = 0x400, scoped, tag = 'input window, operand 6, single buffered']
    #allocation8 [shape = 'u8[512]{0}', space=vmem, size = 0x400, scoped, tag = 'input window, operand 8, single buffered']
    #allocation9 [shape = 's32[1]{0}', space=sflag, size = 0x4, scoped, tag = 'scoped memory for tpu_custom_call.1']
    #allocation10 [shape = 'u8[8192]{0}', space=vmem, size = 0x2000, scoped, tag = 'input window, operand 12, single buffered']
    #allocation11 [shape = 'u8[4096]{0}', space=vmem, size = 0x1000, scoped, tag = 'output window, operand 0, single buffered']
    %19 = vsyncpa [#allocation3], 0
    %20 = vsyncpa [#allocation6], 0
    %21 = vsyncpa [#allocation9], 0
    %22 = vsyncpa [#allocation4], 0
    // Predicated region
    $region2: #{tpu_custom_call.1} parent=1 // pred_check
      _
    $region3: #{tpu_custom_call.1} parent=1 // pred_check_branch
      %24 = sbr.rel (0) target = $region5
    $region4: #{tpu_custom_call.1} parent=1 // pred_region
      _
    $region5: #{tpu_custom_call.1} parent=1 // pred_fallthru
      _
    // Predicated region
    $region6: #{tpu_custom_call.1} parent=1 // pred_check
      _
    $region7: #{tpu_custom_call.1} parent=1 // pred_check_branch
      %26 = sbr.rel (0) target = $region9
    $region8: #{tpu_custom_call.1} parent=1 // pred_region
      %28 = vsyncadd [#allocation3], 0
      %s30 = sshll.u32 %s1, 4
      %s31 = int_to_ptr.hbm [resolvable:$true] %s30
      %s32 = sshll.u32 [#allocation2], 4
      %s33 = int_to_ptr.vmem [resolvable:$true] %s32
      %35 = dma.hbm_to_vmem [thread:$0]  %s31, 128, %s33, [#allocation3]
    $region9: #{tpu_custom_call.1} parent=1 // pred_fallthru
      _
    // Predicated region
    $region10: #{tpu_custom_call.1} parent=1 // pred_check
      _
    $region11: #{tpu_custom_call.1} parent=1 // pred_check_branch
      %37 = sbr.rel (0) target = $region13
    $region12: #{tpu_custom_call.1} parent=1 // pred_region
      _
    $region13: #{tpu_custom_call.1} parent=1 // pred_fallthru
      _
    // Predicated region
    $region14: #{tpu_custom_call.1} parent=1 // pred_check
      _
    $region15: #{tpu_custom_call.1} parent=1 // pred_check_branch
      %39 = sbr.rel (0) target = $region17
    $region16: #{tpu_custom_call.1} parent=1 // pred_region
      _
    $region17: #{tpu_custom_call.1} parent=1 // pred_fallthru
      _
    // Predicated region
    $region18: #{tpu_custom_call.1} parent=1 // pred_check
      _
    $region19: #{tpu_custom_call.1} parent=1 // pred_check_branch
      %41 = sbr.rel (0) target = $region21
    $region20: #{tpu_custom_call.1} parent=1 // pred_region
      _
    $region21: #{tpu_custom_call.1} parent=1 // pred_fallthru
      _
    // Predicated region
    $region22: #{tpu_custom_call.1} parent=1 // pred_check
      _
    $region23: #{tpu_custom_call.1} parent=1 // pred_check_branch
      %43 = sbr.rel (0) target = $region25
    $region24: #{tpu_custom_call.1} parent=1 // pred_region
      %45 = vsyncadd [#allocation6], 0
      %s46 = sshll.u32 %s5, 4
      %s47 = int_to_ptr.hbm [resolvable:$true] %s46
      %s48 = sshll.u32 [#allocation5], 4
      %s49 = int_to_ptr.vmem [resolvable:$true] %s48
      %54 = dma.hbm_to_vmem [thread:$0]  %s47, 256, %s49, [#allocation6], 64, 64, 4
    $region25: #{tpu_custom_call.1} parent=1 // pred_fallthru
      _
    // Predicated region
    $region26: #{tpu_custom_call.1} parent=1 // pred_check
      _
    $region27: #{tpu_custom_call.1} parent=1 // pred_check_branch
      %56 = sbr.rel (0) target = $region29
    $region28: #{tpu_custom_call.1} parent=1 // pred_region
      %58 = vsyncadd [#allocation6], 0
      %s60 = sshll.u32 %s6, 4
      %s61 = int_to_ptr.hbm [resolvable:$true] %s60
      %s62 = sshll.u32 [#allocation7], 4
      %s63 = int_to_ptr.vmem [resolvable:$true] %s62
      %65 = dma.hbm_to_vmem [thread:$0]  %s61, 16, %s63, [#allocation6]
    $region29: #{tpu_custom_call.1} parent=1 // pred_fallthru
      _
    // Predicated region
    $region30: #{tpu_custom_call.1} parent=1 // pred_check
      _
    $region31: #{tpu_custom_call.1} parent=1 // pred_check_branch
      %67 = sbr.rel (0) target = $region33
    $region32: #{tpu_custom_call.1} parent=1 // pred_region
      _
    $region33: #{tpu_custom_call.1} parent=1 // pred_fallthru
      _
    // Predicated region
    $region34: #{tpu_custom_call.1} parent=1 // pred_check
      _
    $region35: #{tpu_custom_call.1} parent=1 // pred_check_branch
      %69 = sbr.rel (0) target = $region37
    $region36: #{tpu_custom_call.1} parent=1 // pred_region
      %71 = vsyncadd [#allocation9], 0
      %s73 = sshll.u32 %s8, 4
      %s74 = int_to_ptr.hbm [resolvable:$true] %s73
      %s75 = sshll.u32 [#allocation8], 4
      %s76 = int_to_ptr.vmem [resolvable:$true] %s75
      %78 = dma.hbm_to_vmem [thread:$0]  %s74, 16, %s76, [#allocation9]
    $region37: #{tpu_custom_call.1} parent=1 // pred_fallthru
      _
    // Predicated region
    $region38: #{tpu_custom_call.1} parent=1 // pred_check
      _
    $region39: #{tpu_custom_call.1} parent=1 // pred_check_branch
      %80 = sbr.rel (0) target = $region41
    $region40: #{tpu_custom_call.1} parent=1 // pred_region
      _
    $region41: #{tpu_custom_call.1} parent=1 // pred_fallthru
      _
    // Predicated region
    $region42: #{tpu_custom_call.1} parent=1 // pred_check
      _
    $region43: #{tpu_custom_call.1} parent=1 // pred_check_branch
      %82 = sbr.rel (0) target = $region45
    $region44: #{tpu_custom_call.1} parent=1 // pred_region
      _
    $region45: #{tpu_custom_call.1} parent=1 // pred_fallthru
      _
    // Predicated region
    $region46: #{tpu_custom_call.1} parent=1 // pred_check
      _
    $region47: #{tpu_custom_call.1} parent=1 // pred_check_branch
      %84 = sbr.rel (0) target = $region49
    $region48: #{tpu_custom_call.1} parent=1 // pred_region
      _
    $region49: #{tpu_custom_call.1} parent=1 // pred_fallthru
      _
    // Predicated region
    $region50: #{tpu_custom_call.1} parent=1 // pred_check
      _
    $region51: #{tpu_custom_call.1} parent=1 // pred_check_branch
      %86 = sbr.rel (0) target = $region53
    $region52: #{tpu_custom_call.1} parent=1 // pred_region
      %88 = vsyncadd [#allocation9], 0
      %s89 = sshll.u32 %s12, 4
      %s90 = int_to_ptr.hbm [resolvable:$true] %s89
      %s91 = sshll.u32 [#allocation10], 4
      %s92 = int_to_ptr.vmem [resolvable:$true] %s91
      %97 = dma.hbm_to_vmem [thread:$0]  %s90, 256, %s92, [#allocation9], 64, 64, 4
    $region53: #{tpu_custom_call.1} parent=1 // pred_fallthru
      _
    // Predicated region
    $region54: #{tpu_custom_call.1} parent=1 // pred_check
      _
    $region55: #{tpu_custom_call.1} parent=1 // pred_check_branch
      %99 = sbr.rel (0) target = $region57
    $region56: #{tpu_custom_call.1} parent=1 // pred_region
      _
    $region57: #{tpu_custom_call.1} parent=1 // pred_fallthru
      _
    // Predicated region
    $region58: #{tpu_custom_call.1} parent=1 // pred_check
      _
    $region59: #{tpu_custom_call.1} parent=1 // pred_check_branch
      %101 = sbr.rel (0) target = $region61
    $region60: #{tpu_custom_call.1} parent=1 // pred_region
      %103 = dma.done [#allocation3], 128
    $region61: #{tpu_custom_call.1} parent=1 // pred_fallthru
      _
    // Predicated region
    $region62: #{tpu_custom_call.1} parent=1 // pred_check
      _
    $region63: #{tpu_custom_call.1} parent=1 // pred_check_branch
      %105 = sbr.rel (0) target = $region65
    $region64: #{tpu_custom_call.1} parent=1 // pred_region
      %107 = dma.done [#allocation6], 256
    $region65: #{tpu_custom_call.1} parent=1 // pred_fallthru
      _
    // Predicated region
    $region66: #{tpu_custom_call.1} parent=1 // pred_check
      _
    $region67: #{tpu_custom_call.1} parent=1 // pred_check_branch
      %109 = sbr.rel (0) target = $region69
    $region68: #{tpu_custom_call.1} parent=1 // pred_region
      %111 = dma.done [#allocation6], 16
    $region69: #{tpu_custom_call.1} parent=1 // pred_fallthru
      _
    // Predicated region
    $region70: #{tpu_custom_call.1} parent=1 // pred_check
      _
    $region71: #{tpu_custom_call.1} parent=1 // pred_check_branch
      %113 = sbr.rel (0) target = $region73
    $region72: #{tpu_custom_call.1} parent=1 // pred_region
      %115 = dma.done [#allocation9], 16
    $region73: #{tpu_custom_call.1} parent=1 // pred_fallthru
      _
    // Predicated region
    $region74: #{tpu_custom_call.1} parent=1 // pred_check
      _
    $region75: #{tpu_custom_call.1} parent=1 // pred_check_branch
      %117 = sbr.rel (0) target = $region77
    $region76: #{tpu_custom_call.1} parent=1 // pred_region
      %119 = dma.done [#allocation9], 256
    $region77: #{tpu_custom_call.1} parent=1 // pred_fallthru
      _
    %v121 = vld [vmem:[#allocation2] sm:$0xff]
    %v122 = vpack.c.bf16 %v121, %v121
    %v123 = vld [vmem:[%s0] sm:$0xff]
    %v124 = vlaneseq
    %v125 = vand.u32 %v124, 127
    %126 = vset.pattern.permute.xlu0 0
    %127 = vperm.xlu0 %126, %v123
    %v128 = vpop.permute.xlu0 %127
    %vm129 = vcmp.eq.s32.totalorder %v125, %v128
    %v130 = vsel %vm129, 1, 0
    %v131 = vcvt.s32.f32 %v130
    %v132 = vpack.c.bf16 %v131, %v131
    %v133 = vld [vmem:[%s3] sm:$0xf]
    %v134 = vld [vmem:[%s3 + $0x4] sm:$0xf]
    %v135 = vld [vmem:[%s3 + $0x8] sm:$0xf]
    %v136 = vld [vmem:[%s3 + $0xc] sm:$0xf]
    %v137 = vld [vmem:[%s3 + $0x10] sm:$0xf]
    %v138 = vld [vmem:[%s3 + $0x14] sm:$0xf]
    %v139 = vld [vmem:[%s3 + $0x18] sm:$0xf]
    %v140 = vld [vmem:[%s3 + $0x1c] sm:$0xf]
    %v149 = vunpack.c.l.b16 %v133
    %v150 = vunpack.c.l.b16 %v134
    %v151 = vunpack.c.l.b16 %v135
    %v152 = vunpack.c.l.b16 %v136
    %v153 = vunpack.c.l.b16 %v137
    %v154 = vunpack.c.l.b16 %v138
    %v155 = vunpack.c.l.b16 %v139
    %v156 = vunpack.c.l.b16 %v140
    %v157 = vpack.c.b16 %v150, %v149
    %v158 = vpack.c.b16 %v152, %v151
    %v159 = vpack.c.b16 %v154, %v153
    %v160 = vpack.c.b16 %v156, %v155
    %vm165 = vcmask 523264
    %v167 = vsel %vm165, %v132, 0
    %169 = vmatpush.bf16.msra.mxu0 0
    %170 = vmatpush.bf16.msra.mxu0 0
    %171 = vmatpush.bf16.msra.mxu0 0
    %172 = vmatpush.bf16.msra.mxu0 0
    %173 = vmatpush.bf16.msra.mxu0 %v160
    %174 = vmatpush.bf16.msra.mxu0 %v159
    %175 = vmatpush.bf16.msra.mxu0 %v158
    %176 = vmatpush.bf16.msra.mxu0 %v157
    %177 = vmatmul.bf16.gmra.mxu0 %v167
    %v178 = vpop.f32.mrf.mxu0
    %v179 = vadd.f32 0.0, %v178
    %v180 = vpop.f32.mrf.mxu0
    %181 = vdwg.mxu0
    %v182 = vpack.c.bf16 %v179, %v179
    %v183 = vld [vmem:[%s4] sm:$0xf]
    %v184 = vld [vmem:[%s4 + $0x4] sm:$0xf]
    %v185 = vld [vmem:[%s4 + $0x8] sm:$0xf]
    %v186 = vld [vmem:[%s4 + $0xc] sm:$0xf]
    %v191 = vunpack.c.l.b16 %v183
    %v192 = vunpack.c.l.b16 %v184
    %v193 = vunpack.c.l.b16 %v185
    %v194 = vunpack.c.l.b16 %v186
    %v195 = vpack.c.b16 %v192, %v191
    %v196 = vpack.c.b16 %v194, %v193
    %vm199 = vcmask 261120
    %v201 = vsel %vm199, %v182, 0
    %203 = vmatpush.bf16.msra.mxu0 0
    %204 = vmatpush.bf16.msra.mxu0 0
    %205 = vmatpush.bf16.msra.mxu0 0
    %206 = vmatpush.bf16.msra.mxu0 0
    %207 = vmatpush.bf16.msra.mxu0 0
    %208 = vmatpush.bf16.msra.mxu0 0
    %209 = vmatpush.bf16.msra.mxu0 %v196
    %210 = vmatpush.bf16.msra.mxu0 %v195
    %211 = vmatmul.bf16.gmra.mxu0 %v201
    %v212 = vpop.f32.mrf.mxu0
    %v213 = vadd.f32 0.0, %v212
    %v214 = vpop.f32.mrf.mxu0
    %215 = vdwg.mxu0
    %v216 = vld [vmem:[#allocation5] sm:$0xf]
    %v217 = vld [vmem:[#allocation5 + $0x4] sm:$0xf]
    %v218 = vld [vmem:[#allocation5 + $0x8] sm:$0xf]
    %v219 = vld [vmem:[#allocation5 + $0xc] sm:$0xf]
    %v224 = vunpack.c.l.b16 %v216
    %v225 = vunpack.c.l.b16 %v217
    %v226 = vunpack.c.l.b16 %v218
    %v227 = vunpack.c.l.b16 %v219
    %v228 = vpack.c.b16 %v225, %v224
    %v229 = vpack.c.b16 %v227, %v226
    %v233 = vsel %vm199, %v122, 0
    %235 = vmatpush.bf16.msra.mxu0 0
    %236 = vmatpush.bf16.msra.mxu0 0
    %237 = vmatpush.bf16.msra.mxu0 0
    %238 = vmatpush.bf16.msra.mxu0 0
    %239 = vmatpush.bf16.msra.mxu0 0
    %240 = vmatpush.bf16.msra.mxu0 0
    %241 = vmatpush.bf16.msra.mxu0 %v229
    %242 = vmatpush.bf16.msra.mxu0 %v228
    %243 = vmatmul.bf16.gmra.mxu0 %v233
    %v244 = vpop.f32.mrf.mxu0
    %v245 = vadd.f32 0.0, %v244
    %v246 = vpop.f32.mrf.mxu0
    %247 = vdwg.mxu0
    %v248 = vadd.f32 %v213, %v245
    %v249 = vld [vmem:[#allocation7] sm:$0x1]
    %v251 = vperm.slane %v249, 0
    %v253 = vadd.f32 %v248, %v251
    %vm254 = vcmask 64512
    %v255 = vsel %vm254, %v253, -inf
    %256 = vmax.xlane.f32.xlu0 %v255
    %v257 = vpop.xlane.xlu0 %256
    %v258 = vsub.f32 %v253, %v257
    %v259 = vmul.f32 %v258, 1.442695
    %v260 = vpow.pop %v259
    %v261 = vsel %vm254, %v260, 0.0
    %262 = vadd.xlane.f32.xlu0 %v261
    %v263 = vpop.xlane.xlu0 %262
    %v264 = vrcp.pop %v263
    %v265 = vmul.f32 %v260, %v264
    %v266 = vperm.slane %v265, 0
    %v267 = vlaneseq
    %v268 = vshrl.u32 %v267, 7
    %270 = vset.pattern.permute.xlu0 %v268
    %271 = vperm.xlu0 %270, %v266
    %v272 = vpop.permute.xlu0 %271
    %v273 = vperm.slane %v265, 1
    %v274 = vlaneseq
    %v275 = vshrl.u32 %v274, 7
    %277 = vset.pattern.permute.xlu0 %v275
    %278 = vperm.xlu0 %277, %v273
    %v279 = vpop.permute.xlu0 %278
    %v280 = vperm.slane %v265, 2
    %v281 = vlaneseq
    %v282 = vshrl.u32 %v281, 7
    %284 = vset.pattern.permute.xlu0 %v282
    %285 = vperm.xlu0 %284, %v280
    %v286 = vpop.permute.xlu0 %285
    %v287 = vperm.slane %v265, 3
    %v288 = vlaneseq
    %v289 = vshrl.u32 %v288, 7
    %291 = vset.pattern.permute.xlu0 %v289
    %292 = vperm.xlu0 %291, %v287
    %v293 = vpop.permute.xlu0 %292
    %v294 = vperm.slane %v265, 4
    %v295 = vlaneseq
    %v296 = vshrl.u32 %v295, 7
    %298 = vset.pattern.permute.xlu0 %v296
    %299 = vperm.xlu0 %298, %v294
    %v300 = vpop.permute.xlu0 %299
    %v301 = vperm.slane %v265, 5
    %v302 = vlaneseq
    %v303 = vshrl.u32 %v302, 7
    %305 = vset.pattern.permute.xlu0 %v303
    %306 = vperm.xlu0 %305, %v301
    %v307 = vpop.permute.xlu0 %306
    %v308 = vperm.slane %v265, 6
    %v309 = vlaneseq
    %v310 = vshrl.u32 %v309, 7
    %312 = vset.pattern.permute.xlu0 %v310
    %313 = vperm.xlu0 %312, %v308
    %v314 = vpop.permute.xlu0 %313
    %v315 = vperm.slane %v265, 7
    %v316 = vlaneseq
    %v317 = vshrl.u32 %v316, 7
    %319 = vset.pattern.permute.xlu0 %v317
    %320 = vperm.xlu0 %319, %v315
    %v321 = vpop.permute.xlu0 %320
    %v322 = vld [vmem:[%s2] sm:$0xff]
    %v323 = vld [vmem:[%s2 + $0x8] sm:$0xff]
    %v324 = vld [vmem:[%s2 + $0x10] sm:$0xff]
    %v325 = vld [vmem:[%s2 + $0x18] sm:$0xff]
    %v326 = vld [vmem:[%s2 + $0x20] sm:$0xff]
    %v327 = vld [vmem:[%s2 + $0x28] sm:$0xff]
    %v328 = vld [vmem:[%s2 + $0x30] sm:$0xff]
    %v329 = vld [vmem:[%s2 + $0x38] sm:$0xff]
    %v330 = vmul.f32 %v272, %v322
    %v331 = vmul.f32 %v279, %v323
    %v332 = vmul.f32 %v286, %v324
    %v333 = vmul.f32 %v293, %v325
    %v334 = vmul.f32 %v300, %v326
    %v335 = vmul.f32 %v307, %v327
    %v336 = vmul.f32 %v314, %v328
    %v337 = vmul.f32 %v321, %v329
    %v338 = vsel %vm165, %v330, 0.0
    %v339 = vrot.slane %v338, 4
    %v340 = vadd.f32 %v338, %v339
    %v341 = vrot.slane %v340, 2
    %v342 = vadd.f32 %v340, %v341
    %v343 = vrot.slane %v342, 1
    %v344 = vadd.f32 %v342, %v343
    %v345 = vsel %vm165, %v331, 0.0
    %v346 = vrot.slane %v345, 4
    %v347 = vadd.f32 %v345, %v346
    %v348 = vrot.slane %v347, 2
    %v349 = vadd.f32 %v347, %v348
    %v350 = vrot.slane %v349, 1
    %v351 = vadd.f32 %v349, %v350
    %v352 = vsel %vm165, %v332, 0.0
    %v353 = vrot.slane %v352, 4
    %v354 = vadd.f32 %v352, %v353
    %v355 = vrot.slane %v354, 2
    %v356 = vadd.f32 %v354, %v355
    %v357 = vrot.slane %v356, 1
    %v358 = vadd.f32 %v356, %v357
    %v359 = vsel %vm165, %v333, 0.0
    %v360 = vrot.slane %v359, 4
    %v361 = vadd.f32 %v359, %v360
    %v362 = vrot.slane %v361, 2
    %v363 = vadd.f32 %v361, %v362
    %v364 = vrot.slane %v363, 1
    %v365 = vadd.f32 %v363, %v364
    %v366 = vsel %vm165, %v334, 0.0
    %v367 = vrot.slane %v366, 4
    %v368 = vadd.f32 %v366, %v367
    %v369 = vrot.slane %v368, 2
    %v370 = vadd.f32 %v368, %v369
    %v371 = vrot.slane %v370, 1
    %v372 = vadd.f32 %v370, %v371
    %v373 = vsel %vm165, %v335, 0.0
    %v374 = vrot.slane %v373, 4
    %v375 = vadd.f32 %v373, %v374
    %v376 = vrot.slane %v375, 2
    %v377 = vadd.f32 %v375, %v376
    %v378 = vrot.slane %v377, 1
    %v379 = vadd.f32 %v377, %v378
    %v380 = vsel %vm165, %v336, 0.0
    %v381 = vrot.slane %v380, 4
    %v382 = vadd.f32 %v380, %v381
    %v383 = vrot.slane %v382, 2
    %v384 = vadd.f32 %v382, %v383
    %v385 = vrot.slane %v384, 1
    %v386 = vadd.f32 %v384, %v385
    %v387 = vsel %vm165, %v337, 0.0
    %v388 = vrot.slane %v387, 4
    %v389 = vadd.f32 %v387, %v388
    %v390 = vrot.slane %v389, 2
    %v391 = vadd.f32 %v389, %v390
    %v392 = vrot.slane %v391, 1
    %v393 = vadd.f32 %v391, %v392
    %v394 = vpack.c.bf16 %v344, %v344
    %v395 = vpack.c.bf16 %v351, %v351
    %v396 = vpack.c.bf16 %v358, %v358
    %v397 = vpack.c.bf16 %v365, %v365
    %v398 = vpack.c.bf16 %v372, %v372
    %v399 = vpack.c.bf16 %v379, %v379
    %v400 = vpack.c.bf16 %v386, %v386
    %v401 = vpack.c.bf16 %v393, %v393
    %v402 = vld [vmem:[%s7] sm:$0xf]
    %v403 = vld [vmem:[%s7 + $0x4] sm:$0xf]
    %v404 = vld [vmem:[%s7 + $0x8] sm:$0xf]
    %v405 = vld [vmem:[%s7 + $0xc] sm:$0xf]
    %v406 = vld [vmem:[%s7 + $0x10] sm:$0xf]
    %v407 = vld [vmem:[%s7 + $0x14] sm:$0xf]
    %v408 = vld [vmem:[%s7 + $0x18] sm:$0xf]
    %v409 = vld [vmem:[%s7 + $0x1c] sm:$0xf]
    %v418 = vunpack.c.l.b16 %v394
    %v419 = vunpack.c.l.b16 %v395
    %v420 = vunpack.c.l.b16 %v396
    %v421 = vunpack.c.l.b16 %v397
    %v422 = vunpack.c.l.b16 %v398
    %v423 = vunpack.c.l.b16 %v399
    %v424 = vunpack.c.l.b16 %v400
    %v425 = vunpack.c.l.b16 %v401
    %vm426 = vcmask 1041409
    %v427 = vsel %vm426, %v419, %v418
    %vm428 = vcmask 1042434
    %v429 = vsel %vm428, %v420, %v427
    %vm430 = vcmask 1043459
    %v431 = vsel %vm430, %v421, %v429
    %vm432 = vcmask 1044484
    %v433 = vsel %vm432, %v422, %v431
    %vm434 = vcmask 1045509
    %v435 = vsel %vm434, %v423, %v433
    %vm436 = vcmask 1046534
    %v437 = vsel %vm436, %v424, %v435
    %vm438 = vcmask 1047559
    %v439 = vsel %vm438, %v425, %v437
    %v440 = vpack.c.b16 %v439, %v439
    %v449 = vunpack.c.l.b16 %v402
    %v450 = vunpack.c.l.b16 %v403
    %v451 = vunpack.c.l.b16 %v404
    %v452 = vunpack.c.l.b16 %v405
    %v453 = vunpack.c.l.b16 %v406
    %v454 = vunpack.c.l.b16 %v407
    %v455 = vunpack.c.l.b16 %v408
    %v456 = vunpack.c.l.b16 %v409
    %v457 = vpack.c.b16 %v450, %v449
    %v458 = vpack.c.b16 %v452, %v451
    %v459 = vpack.c.b16 %v454, %v453
    %v460 = vpack.c.b16 %v456, %v455
    %v466 = vsel %vm165, %v440, 0
    %468 = vmatpush.bf16.msra.mxu0 0
    %469 = vmatpush.bf16.msra.mxu0 0
    %470 = vmatpush.bf16.msra.mxu0 0
    %471 = vmatpush.bf16.msra.mxu0 0
    %472 = vmatpush.bf16.msra.mxu0 %v460
    %473 = vmatpush.bf16.msra.mxu0 %v459
    %474 = vmatpush.bf16.msra.mxu0 %v458
    %475 = vmatpush.bf16.msra.mxu0 %v457
    %476 = vmatmul.bf16.gmra.mxu0 %v466
    %v477 = vpop.f32.mrf.mxu0
    %v478 = vadd.f32 0.0, %v477
    %v479 = vpop.f32.mrf.mxu0
    %480 = vdwg.mxu0
    %482 = vrot.lane.b32.xlu0 %v478, 8
    %v483 = vpop.permute.xlu0 %482
    %v485 = vadd.f32 %v213, %v483
    %v486 = vld [vmem:[#allocation8] sm:$0x1]
    %v488 = vperm.slane %v486, 0
    %489 = vrot.lane.b32.xlu0 %v488, 8
    %v490 = vpop.permute.xlu0 %489
    %v492 = vadd.f32 %v485, %v490
    %v493 = vmax.f32 %v492, 0.0
    %v494 = vpack.c.bf16 %v493, %v493
    %v495 = vld [vmem:[%s9] sm:$0xf]
    %v496 = vld [vmem:[%s9 + $0x4] sm:$0xf]
    %v497 = vld [vmem:[%s9 + $0x8] sm:$0xf]
    %v498 = vld [vmem:[%s9 + $0xc] sm:$0xf]
    %v499 = vld [vmem:[%s10] sm:$0x1]
    %v501 = vperm.slane %v499, 0
    %504 = vrot.lane.b32.xlu0 %v494, 120
    %v505 = vpop.permute.xlu0 %504
    %v510 = vunpack.c.l.b16 %v495
    %v511 = vunpack.c.l.b16 %v496
    %v512 = vunpack.c.l.b16 %v497
    %v513 = vunpack.c.l.b16 %v498
    %v514 = vpack.c.b16 %v511, %v510
    %v515 = vpack.c.b16 %v513, %v512
    %v519 = vsel %vm199, %v505, 0
    %521 = vmatpush.bf16.msra.mxu0 0
    %522 = vmatpush.bf16.msra.mxu0 0
    %523 = vmatpush.bf16.msra.mxu0 0
    %524 = vmatpush.bf16.msra.mxu0 0
    %525 = vmatpush.bf16.msra.mxu0 0
    %526 = vmatpush.bf16.msra.mxu0 0
    %527 = vmatpush.bf16.msra.mxu0 %v515
    %528 = vmatpush.bf16.msra.mxu0 %v514
    %529 = vmatmul.bf16.gmra.mxu0 %v519
    %v530 = vpop.f32.mrf.mxu0
    %v531 = vadd.f32 %v501, %v530
    %v532 = vpop.f32.mrf.mxu0
    %533 = vdwg.mxu0
    %v534 = vld [vmem:[%s11] sm:$0x1]
    %v536 = vperm.slane %v534, 0
    %537 = vrot.lane.b32.xlu0 %v536, 8
    %v538 = vpop.permute.xlu0 %537
    %v540 = vadd.f32 %v245, %v538
    %542 = vrot.lane.b32.xlu0 %v540, 120
    %v543 = vpop.permute.xlu0 %542
    %v545 = vadd.f32 %v531, %v543
    %v546 = vxor.u32 %v545, 2147483648
    %v547 = vmul.f32 %v546, 1.442695
    %v548 = vpow.pop %v547
    %v549 = vadd.f32 %v548, 1.0
    %v550 = vrcp.pop %v549
    %v551 = vmul.f32 %v549, %v550
    %v552 = vsub.f32 1.0, %v551
    %v553 = vmul.f32 %v550, %v552
    %v554 = vadd.f32 %v550, %v553
    %vm555 = vweird.f32 %v549
    %vm556 = vweird.f32 %v550
    %vm557 = vmor %vm555, %vm556
    %v558 = vsel %vm557, %v550, %v554
    %v559 = vand.u32 2147483647, %v549
    %vm560 = vcmp.eq.f32.partialorder %v559, 8.507059e+37
    %v561 = vand.u32 %v549, 2147483648
    %v562 = vor.u32 1.1754944e-38, %v561
    %v563 = vsel %vm560, %v562, %v558
    %v564 = vmul.f32 1.0, %v563
    %565 = vrot.lane.b32.xlu0 %v540, 56
    %v566 = vpop.permute.xlu0 %565
    %v568 = vmul.f32 %v564, %v566
    %570 = vrot.lane.b32.xlu0 %v568, 64
    %v571 = vpop.permute.xlu0 %570
    %v573 = vadd.f32 %v531, %v571
    %v574 = vtanh.pop %v573
    %v575 = vsub.f32 1.0, %v564
    %577 = vrot.lane.b32.xlu0 %v574, 96
    %v578 = vpop.permute.xlu0 %577
    %v580 = vmul.f32 %v575, %v578
    %582 = vrot.lane.b32.xlu0 %v121, 32
    %v583 = vpop.permute.xlu0 %582
    %v585 = vmul.f32 %v564, %v583
    %v586 = vadd.f32 %v580, %v585
    %v587 = vpack.c.bf16 %v586, %v586
    %v588 = vld [vmem:[#allocation10] sm:$0xf]
    %v589 = vld [vmem:[#allocation10 + $0x4] sm:$0xf]
    %v590 = vld [vmem:[#allocation10 + $0x8] sm:$0xf]
    %v591 = vld [vmem:[#allocation10 + $0xc] sm:$0xf]
    %v592 = vld [vmem:[%s13] sm:$0x1]
    %v594 = vperm.slane %v592, 0
    %597 = vrot.lane.b32.xlu0 %v587, 96
    %v598 = vpop.permute.xlu0 %597
    %v603 = vunpack.c.l.b16 %v588
    %v604 = vunpack.c.l.b16 %v589
    %v605 = vunpack.c.l.b16 %v590
    %v606 = vunpack.c.l.b16 %v591
    %v607 = vpack.c.b16 %v604, %v603
    %v608 = vpack.c.b16 %v606, %v605
    %v612 = vsel %vm199, %v598, 0
    %614 = vmatpush.bf16.msra.mxu0 0
    %615 = vmatpush.bf16.msra.mxu0 0
    %616 = vmatpush.bf16.msra.mxu0 0
    %617 = vmatpush.bf16.msra.mxu0 0
    %618 = vmatpush.bf16.msra.mxu0 0
    %619 = vmatpush.bf16.msra.mxu0 0
    %620 = vmatpush.bf16.msra.mxu0 %v608
    %621 = vmatpush.bf16.msra.mxu0 %v607
    %622 = vmatmul.bf16.gmra.mxu0 %v612
    %v623 = vpop.f32.mrf.mxu0
    %v624 = vadd.f32 %v594, %v623
    %v625 = vpop.f32.mrf.mxu0
    %626 = vdwg.mxu0
    %628 = vrot.lane.b32.xlu0 %v586, 32
    %v629 = vpop.permute.xlu0 %628
    %632 = vrot.lane.b32.xlu0 %v265, 96
    %v633 = vpop.permute.xlu0 %632
    %v635 = vsel %vm165, %v624, %v629
    %vm636 = vcmask 785408
    %v637 = vsel %vm636, %v635, %v633
    %vm638 = vcmask 850944
    %v639 = vsel %vm638, %v637, 0.0
    %640 = vst [vmem:[#allocation11] sm:$0xff] %v639
    // Predicated region
    $region78: #{tpu_custom_call.1} parent=1 // pred_check
      _
    $region79: #{tpu_custom_call.1} parent=1 // pred_check_branch
      %642 = sbr.rel (0) target = $region81
    $region80: #{tpu_custom_call.1} parent=1 // pred_region
      %644 = vsyncadd [#allocation4], 0
      %s646 = sshll.u32 [#allocation11], 4
      %s647 = int_to_ptr.vmem [resolvable:$true] %s646
      %s648 = sshll.u32 %s14, 4
      %s649 = int_to_ptr.hbm [resolvable:$true] %s648
      %651 = dma.vmem_to_hbm [thread:$0]  %s647, 128, %s649, [#allocation4]
    $region81: #{tpu_custom_call.1} parent=1 // pred_fallthru
      _
    // Predicated region
    $region82: #{tpu_custom_call.1} parent=1 // pred_check
      _
    $region83: #{tpu_custom_call.1} parent=1 // pred_check_branch
      %653 = sbr.rel (0) target = $region85
    $region84: #{tpu_custom_call.1} parent=1 // pred_region
      %655 = dma.done [#allocation4], 128
    $region85: #{tpu_custom_call.1} parent=1 // pred_fallthru
      _
    %656 = vsyncpa [#allocation3], 1
    %657 = vsyncpa [#allocation6], 1
    %658 = vsyncpa [#allocation9], 1
    %659 = vsyncpa [#allocation4], 1

</llo_original>
